<compile_context>
chip_gen: v5e
topology: v5e:2x2
jax: 0.10.0
libtpu: 0.0.40
codegen_flags: <defaults>
</compile_context>

<pallas_src>
import functools
import math

import jax
import jax.numpy as jnp
from jax import lax
from jax.experimental import pallas as pl
from jax.experimental.pallas import tpu as pltpu

_M_TARGET = 512    # target output rows (M = rows of H*W) per grid step


def _round_up(x, m):
    return ((x + m - 1) // m) * m


def _vmem_limit_bytes():
    # 3/4 of per-core VMEM, capped; conservative fallback if the query fails.
    try:
        cap = int(pltpu.get_tpu_info().vmem_capacity_bytes)
    except Exception:
        cap = 64 * 1024 * 1024
    return min((cap * 3) // 4, 112 * 1024 * 1024)


# ----------------------------------------------------------------------------
# Pallas kernel: fused im2col (halo tile -> K=KH*KW*C operand) + matmul
#                 + bias + exact SiLU, bf16 output
# ----------------------------------------------------------------------------
def _fused_conv_silu_kernel(x_ref, w_ref, b_ref, o_ref, *, tr, W, C, KH, KW):
    """One grid step computes `tr` output rows of one image.

    x_ref: (1, 1, tr+KH-1, W+KW-1, C) bf16 halo row-tile (auto-pipelined).
    w_ref: (KH*KW*C, OC_pad) bf16 weight matrix (constant block -> DMA'd once).
    b_ref: (1, OC_pad) f32 bias row.
    o_ref: (1, tr*W, OC_pad) bf16 conv+bias+SiLU output tile.
    """
    xin = x_ref[0, 0, :, :, :]                      # (tr+KH-1, W+KW-1, C)

    # Build the single K = KH*KW*C operand by concatenating the 9 shifted taps
    # along the channel axis (column order (i*KW+k)*C + c matches w_ref rows).
    taps = jnp.concatenate(
        [xin[i:i + tr, k:k + W, :] for i in range(KH) for k in range(KW)],
        axis=-1)                                    # (tr, W, KH*KW*C)
    taps = taps.reshape(tr * W, KH * KW * C)

    # One MXU matmul, f32 accumulation internal to the MXU.
    acc = jnp.dot(taps, w_ref[...], preferred_element_type=jnp.float32)
    acc = acc + b_ref[...]

    # Exact SiLU: sigmoid(x) = 0.5*(tanh(x/2)+1)  -> one EUP transcendental.
    y = acc * (0.5 * (jnp.tanh(acc * 0.5) + 1.0))
    o_ref[0, :, :] = y.astype(o_ref.dtype)


def _fused_conv_silu(xp_tiled, w_mat, bias_row, *, N, num_tiles, tr, W, C,
                     KH, KW, H_pad, OC_pad):
    kernel = functools.partial(_fused_conv_silu_kernel,
                               tr=tr, W=W, C=C, KH=KH, KW=KW)
    in_bytes = (N * num_tiles * (tr + KH - 1) * (W + KW - 1) * C * 2
                + KH * KW * C * OC_pad * 2 + OC_pad * 4)
    out_bytes = N * H_pad * W * OC_pad * 2
    cost = pl.CostEstimate(
        flops=2 * N * H_pad * W * KH * KW * C * OC_pad,
        transcendentals=N * H_pad * W * OC_pad,
        bytes_accessed=in_bytes + out_bytes)

    return pl.pallas_call(
        kernel,
        out_shape=jax.ShapeDtypeStruct((N, H_pad * W, OC_pad), jnp.bfloat16),
        grid_spec=pltpu.PrefetchScalarGridSpec(
            num_scalar_prefetch=0,
            grid=(N, num_tiles),
            in_specs=[
                # Halo row-tile per (batch, row-tile) grid point.
                pl.BlockSpec((1, 1, tr + KH - 1, W + KW - 1, C),
                             lambda n, j: (n, j, 0, 0, 0)),
                # Constant blocks: DMA'd once, reused across the whole grid.
                pl.BlockSpec((KH * KW * C, OC_pad), lambda n, j: (0, 0)),
                pl.BlockSpec((1, OC_pad), lambda n, j: (0, 0)),
            ],
            out_specs=pl.BlockSpec((1, tr * W, OC_pad), lambda n, j: (n, j, 0)),
        ),
        compiler_params=pltpu.CompilerParams(
            dimension_semantics=("parallel", "parallel"),
            vmem_limit_bytes=_vmem_limit_bytes(),
        ),
        cost_estimate=cost,
    )(xp_tiled, w_mat, bias_row)


# ----------------------------------------------------------------------------
# Synthetic "TensorRT engine": Conv2d(3x3, s=1, p=1) + bias + SiLU, NCHW I/O
# ----------------------------------------------------------------------------
@jax.jit
def _engine_execute(x_nchw, w_ockhw, bias):
    N, C, H, W = x_nchw.shape
    OC, _, KH, KW = w_ockhw.shape
    pad = (KH - 1) // 2

    # Row-tile selection: ~_M_TARGET output rows per step, tr*W always a
    # multiple of 8 (remainder-safe; never collapses to a full-image tile).
    step = 8 // math.gcd(W, 8)
    tr = max(1, _M_TARGET // W)
    tr = min(tr, H)
    tr = max(step, (tr // step) * step)
    num_tiles = -(-H // tr)
    H_pad = num_tiles * tr

    # Lane-dense OC only when it is cheap; tiny-OC layers keep OC_pad = OC to
    # avoid 16x output write amplification.
    OC_pad = _round_up(OC, 128) if OC >= 64 else OC

    # Layout / dtype prep (fused XLA pass; no 9x im2col blow-up in HBM).
    x_nhwc = jnp.transpose(x_nchw, (0, 2, 3, 1)).astype(jnp.bfloat16)
    xp = jnp.pad(x_nhwc, ((0, 0), (pad, pad + H_pad - H), (pad, pad), (0, 0)))
    # Halo row-tiles: (N, num_tiles, tr+KH-1, W+KW-1, C); overlap is KH-1 rows,
    # so duplication is only ~(tr+KH-1)/tr of the input.
    row_idx = (jnp.arange(num_tiles)[:, None] * tr
               + jnp.arange(tr + KH - 1)[None, :])
    xp_tiled = xp[:, row_idx]

    # Weights [OC, C, KH, KW] -> (KH*KW*C, OC_pad), row index = (kh*KW+kw)*C+c
    # to match the kernel's tap-concatenation order.
    w_mat = jnp.transpose(w_ockhw, (2, 3, 1, 0)).reshape(KH * KW * C, OC)
    w_mat = jnp.pad(w_mat, ((0, 0), (0, OC_pad - OC))).astype(jnp.bfloat16)
    bias_row = jnp.pad(bias, (0, OC_pad - OC)).reshape(1, OC_pad)
    bias_row = bias_row.astype(jnp.float32)

    out = _fused_conv_silu(xp_tiled, w_mat, bias_row, N=N, num_tiles=num_tiles,
                           tr=tr, W=W, C=C, KH=KH, KW=KW, H_pad=H_pad,
                           OC_pad=OC_pad)
    out = out.reshape(N, H_pad, W, OC_pad)[:, :H, :, :OC]
    # Back to the module's external NCHW f32 contract.
    return jnp.transpose(out, (0, 3, 1, 2)).astype(jnp.float32)


# ----------------------------------------------------------------------------
# TRTModule-equivalent dispatcher
# ----------------------------------------------------------------------------
class TRTModuleJAX:
    """Mirrors TRTModule.forward semantics: named bindings, output alloc,
    engine execution, tuple-unwrap for a single output."""

    def __init__(self, weight, bias, input_names=None, output_names=None):
        self.input_names = input_names or ["input"]
        self.output_names = output_names or ["output"]
        self.weight = weight   # (OC, C, KH, KW), float32
        self.bias = bias       # (OC,), float32

    def __call__(self, *inputs):
        # (input_flattener is None -> identity)
        assert len(inputs) == len(self.input_names)
        x = inputs[0]
        outputs = [None] * len(self.output_names)
        # "execute_async_v2"
        outputs[0] = _engine_execute(x, self.weight, self.bias)
        outputs = tuple(outputs)
        if len(outputs) == 1:
            outputs = outputs[0]
        return outputs


# ----------------------------------------------------------------------------
# Pure-JAX reference (bf16-cast inputs to match the kernel's compute dtype)
# ----------------------------------------------------------------------------
def _reference(x_nchw, w_ockhw, bias):
    xb = x_nchw.astype(jnp.bfloat16).astype(jnp.float32)
    wb = w_ockhw.astype(jnp.bfloat16).astype(jnp.float32)
    y = lax.conv_general_dilated(
        xb, wb, window_strides=(1, 1), padding="SAME",
        dimension_numbers=("NCHW", "OIHW", "NCHW"))
    y = y + bias.reshape(1, -1, 1, 1)
    return y * jax.nn.sigmoid(y)


if __name__ == "__main__":
    key = jax.random.PRNGKey(0)
    kx, kw, kb = jax.random.split(key, 3)

    N, C, H, W = 2, 4, 16, 16
    OC, KH, KW = 8, 3, 3

    x = jax.random.normal(kx, (N, C, H, W), dtype=jnp.float32)
    weight = jax.random.normal(kw, (OC, C, KH, KW), dtype=jnp.float32) * 0.1
    bias = jax.random.normal(kb, (OC,), dtype=jnp.float32) * 0.1

    module = TRTModuleJAX(weight, bias,
                          input_names=["input"], output_names=["output"])

    out = module(x)
    out = jax.block_until_ready(out)

    ref = jax.block_until_ready(_reference(x, weight, bias))
    assert out.shape == (N, OC, H, W)
    assert out.dtype == jnp.float32
    assert jnp.allclose(out, ref, atol=3e-2, rtol=3e-2), "mismatch vs reference"

    print("KERNEL_OK")
</pallas_src>

<mosaic_0001>
module attributes {stable_mosaic.version = 11 : i64} {
  func.func @_fused_conv_silu_kernel(%arg0: i32, %arg1: i32, %arg2: memref<1x1x18x18x4xbf16, #tpu.memory_space<vmem>>, %arg3: memref<36x8xbf16, #tpu.memory_space<vmem>>, %arg4: memref<1x8xf32, #tpu.memory_space<vmem>>, %arg5: memref<1x256x8xbf16, #tpu.memory_space<vmem>>) attributes {dimension_semantics = [#tpu.dimension_semantics<parallel>, #tpu.dimension_semantics<parallel>], iteration_bounds = array<i64: 2, 1>, scalar_prefetch = 0 : i64, scratch_operands = 0 : i64, tpu.core_type = #tpu.core_type<tc>, window_params = [{transform_indices = @transform_0, window_bounds = array<i64: 1, 1, 18, 18, 4>}, {pipeline_mode = #tpu.pipeline_mode<synchronous>, transform_indices = @transform_1, window_bounds = array<i64: 36, 8>}, {pipeline_mode = #tpu.pipeline_mode<synchronous>, transform_indices = @transform_2, window_bounds = array<i64: 1, 8>}, {transform_indices = @transform_3, window_bounds = array<i64: 1, 256, 8>}]} {
    %c0 = arith.constant 0 : index
    %c0_0 = arith.constant 0 : index
    %c0_1 = arith.constant 0 : index
    %c0_2 = arith.constant 0 : index
    %c0_3 = arith.constant 0 : index
    %0 = vector.load %arg2[%c0, %c0_0, %c0_1, %c0_2, %c0_3] : memref<1x1x18x18x4xbf16, #tpu.memory_space<vmem>>, vector<1x1x18x18x4xbf16>
    %1 = vector.shape_cast %0 : vector<1x1x18x18x4xbf16> to vector<18x18x4xbf16>
    %2 = vector.extract_strided_slice %1 {offsets = [0, 0, 0], sizes = [16, 16, 4], strides = [1, 1, 1]} : vector<18x18x4xbf16> to vector<16x16x4xbf16>
    %3 = vector.extract_strided_slice %1 {offsets = [0, 1, 0], sizes = [16, 16, 4], strides = [1, 1, 1]} : vector<18x18x4xbf16> to vector<16x16x4xbf16>
    %4 = vector.extract_strided_slice %1 {offsets = [0, 2, 0], sizes = [16, 16, 4], strides = [1, 1, 1]} : vector<18x18x4xbf16> to vector<16x16x4xbf16>
    %5 = vector.extract_strided_slice %1 {offsets = [1, 0, 0], sizes = [16, 16, 4], strides = [1, 1, 1]} : vector<18x18x4xbf16> to vector<16x16x4xbf16>
    %6 = vector.extract_strided_slice %1 {offsets = [1, 1, 0], sizes = [16, 16, 4], strides = [1, 1, 1]} : vector<18x18x4xbf16> to vector<16x16x4xbf16>
    %7 = vector.extract_strided_slice %1 {offsets = [1, 2, 0], sizes = [16, 16, 4], strides = [1, 1, 1]} : vector<18x18x4xbf16> to vector<16x16x4xbf16>
    %8 = vector.extract_strided_slice %1 {offsets = [2, 0, 0], sizes = [16, 16, 4], strides = [1, 1, 1]} : vector<18x18x4xbf16> to vector<16x16x4xbf16>
    %9 = vector.extract_strided_slice %1 {offsets = [2, 1, 0], sizes = [16, 16, 4], strides = [1, 1, 1]} : vector<18x18x4xbf16> to vector<16x16x4xbf16>
    %10 = vector.extract_strided_slice %1 {offsets = [2, 2, 0], sizes = [16, 16, 4], strides = [1, 1, 1]} : vector<18x18x4xbf16> to vector<16x16x4xbf16>
    %11 = tpu.concatenate %2, %3, %4, %5, %6, %7, %8, %9, %10 in 2 : vector<16x16x4xbf16>, vector<16x16x4xbf16>, vector<16x16x4xbf16>, vector<16x16x4xbf16>, vector<16x16x4xbf16>, vector<16x16x4xbf16>, vector<16x16x4xbf16>, vector<16x16x4xbf16>, vector<16x16x4xbf16> -> vector<16x16x36xbf16>
    %12 = vector.shape_cast %11 : vector<16x16x36xbf16> to vector<256x36xbf16>
    %c0_4 = arith.constant 0 : index
    %c0_5 = arith.constant 0 : index
    %13 = vector.load %arg3[%c0_4, %c0_5] : memref<36x8xbf16, #tpu.memory_space<vmem>>, vector<36x8xbf16>
    %cst = arith.constant dense<0.000000e+00> : vector<256x8xf32>
    %14 = tpu.matmul %12, %13, %cst {dimension_numbers = #tpu.dot_dimension_numbers<[1], [0], [0], [1], [0, 0, 1, 1], [], []>} : vector<256x36xbf16>, vector<36x8xbf16>, vector<256x8xf32> -> vector<256x8xf32>
    %c0_6 = arith.constant 0 : index
    %c0_7 = arith.constant 0 : index
    %15 = vector.load %arg4[%c0_6, %c0_7] : memref<1x8xf32, #tpu.memory_space<vmem>>, vector<1x8xf32>
    %16 = vector.broadcast %15 : vector<1x8xf32> to vector<256x8xf32>
    %17 = arith.addf %14, %16 : vector<256x8xf32>
    %cst_8 = arith.constant 5.000000e-01 : f32
    %18 = vector.broadcast %cst_8 : f32 to vector<256x8xf32>
    %19 = arith.mulf %17, %18 : vector<256x8xf32>
    %20 = math.tanh %19 : vector<256x8xf32>
    %cst_9 = arith.constant 1.000000e+00 : f32
    %21 = vector.broadcast %cst_9 : f32 to vector<256x8xf32>
    %22 = arith.addf %20, %21 : vector<256x8xf32>
    %cst_10 = arith.constant 5.000000e-01 : f32
    %23 = vector.broadcast %cst_10 : f32 to vector<256x8xf32>
    %24 = arith.mulf %23, %22 : vector<256x8xf32>
    %25 = arith.mulf %17, %24 : vector<256x8xf32>
    %26 = arith.truncf %25 : vector<256x8xf32> to vector<256x8xbf16>
    %c0_11 = arith.constant 0 : index
    %c0_12 = arith.constant 0 : index
    %c0_13 = arith.constant 0 : index
    %27 = vector.load %arg5[%c0_11, %c0_12, %c0_13] : memref<1x256x8xbf16, #tpu.memory_space<vmem>>, vector<1x256x8xbf16>
    %28 = vector.shape_cast %27 : vector<1x256x8xbf16> to vector<256x8xbf16>
    %29 = vector.shape_cast %26 : vector<256x8xbf16> to vector<1x256x8xbf16>
    tpu.vector_store %arg5[%c0_11, %c0_12, %c0_13], %29 {strides = array<i32>} : memref<1x256x8xbf16, #tpu.memory_space<vmem>>, vector<1x256x8xbf16>,
    return
  }
  func.func @transform_0(%arg0: i32, %arg1: i32) -> (i32, i32, i32, i32, i32) {
    %c0_i32 = arith.constant 0 : i32
    %c0_i32_0 = arith.constant 0 : i32
    %c0_i32_1 = arith.constant 0 : i32
    %c0_i32_2 = arith.constant 0 : i32
    return %arg0, %arg1, %c0_i32, %c0_i32_0, %c0_i32_1 : i32, i32, i32, i32, i32
  }
  func.func @transform_1(%arg0: i32, %arg1: i32) -> (i32, i32) {
    %c0_i32 = arith.constant 0 : i32
    %c0_i32_0 = arith.constant 0 : i32
    %c0_i32_1 = arith.constant 0 : i32
    return %c0_i32, %c0_i32_0 : i32, i32
  }
  func.func @transform_2(%arg0: i32, %arg1: i32) -> (i32, i32) {
    %c0_i32 = arith.constant 0 : i32
    %c0_i32_0 = arith.constant 0 : i32
    %c0_i32_1 = arith.constant 0 : i32
    return %c0_i32, %c0_i32_0 : i32, i32
  }
  func.func @transform_3(%arg0: i32, %arg1: i32) -> (i32, i32, i32) {
    %c0_i32 = arith.constant 0 : i32
    %c0_i32_0 = arith.constant 0 : i32
    return %arg0, %arg1, %c0_i32 : i32, i32, i32
  }
}

</mosaic_0001>

<llo_original>
// kernel: _engine_execute.1
$region0: #{_engine_execute.1}
  #allocation0 [shape = 'u32[]', space=smem, size = 0x4, offset = 0x4, fixed_abs, tag = 'smem constant byte address 0x4 - core index']
  #allocation1 [shape = 'u32[72,128]{1,0:T(1,128)}', space=vmem, size = 0x9000, scoped, tag = 'internal scratch']
  %s0 = inlined_call_operand.vmem [shape: bf16[2,1,18,18,4], index: 0, kind: input, shape index: {}]
  %s1 = inlined_call_operand.vmem [shape: bf16[36,8], index: 1, kind: input, shape index: {}]
  %s2 = inlined_call_operand.vmem [shape: f32[1,8], index: 2, kind: input, shape index: {}]
  %s3 = inlined_call_operand.vmem [shape: bf16[2,256,8], index: 3, kind: output, shape index: {}]
  %s4 = sld [smem:[#allocation0]]
  $region45: #{_engine_execute.1} parent=0
    _
  %s6 = ssub.s32 1, %s4
  %s7 = scalar_select 0, %s6, %s4
  loop: start=0, step=1, limit=4
  $region2: #{_engine_execute.1} parent=0 // loop_pre_header
    _
  $region3: #{_engine_execute.1} parent=0 // loop_header
    %s9 = sphi 0, %s13
    %p10 = scmp.ge.s32.totalorder %s9, 4
    %s16 = sphi 0, %s28
    %s17 = sphi 0, %s24
    %s18 = sphi 0, %s16
    %s19 = sphi 0, %s17
    %s20 = sphi 0, %s18
    %s21 = sphi 0, %s19
    %s33 = sphi 0, %s35
    %s36 = sphi 0, %s33
    %s37 = sphi 0, %s36
    %s53 = sphi 0, %s37
    %s57 = sphi 0, %s57
    %s59 = sphi 0, %s57
    %s60 = sphi 0, %s59
    %s74 = sphi 0, %s60
    %s78 = sphi 0, %s78
    %s80 = sphi 0, %s78
    %s81 = sphi 0, %s80
    %s95 = sphi 0, %s81
    %s103 = sphi 0, %s105
    %s106 = sphi 0, %s103
    %s107 = sphi 0, %s106
    %s123 = sphi 0, %s107
  $region4: #{_engine_execute.1} parent=0 // loop_header_branch
    %12 = sbr.rel (%p10) target = $region8
  $region5: #{_engine_execute.1} parent=0 // loop_body
    %s14 = ssub.s32 %s9, 1
    %s15 = ssub.s32 %s9, 2
    %s22 = sadd.s32 1, %s17
    %p23 = scmp.ge.s32.totalorder %s22, 1
    %s24 = scalar_select %p23, 0, %s22
    %s25 = sadd.s32 1, %s16
    %s26 = scalar_select %p23, %s25, %s16
    %p27 = scmp.ge.s32.totalorder %s26, 2
    %s28 = scalar_select %p27, 0, %s26
    %s29 = ssub.s32 %s16, %s28
    %s30 = ssub.s32 %s17, %s24
    %s31 = sor.u32 %s29, %s30
    %p32 = scmp.eq.s32.totalorder %s31, 0
    %s34 = sadd.s32 %s33, 1
    %s35 = scalar_select %p32, %s33, %s34
    %p38 = pneg %p32
    %p39 = scmp.eq.s32.totalorder %s9, 1
    %p40 = por %p38, %p39
    %p41 = scmp.ne.s32.totalorder %s33, %s36
    %p42 = scmp.eq.s32.totalorder %s9, 0
    %p43 = por %p41, %p42
    %p44 = scmp.ne.s32.totalorder %s33, %s36
    %p45 = scmp.eq.s32.totalorder %s14, 1
    %p46 = por %p44, %p45
    %p47 = scmp.ne.s32.totalorder %s36, %s37
    %p48 = scmp.eq.s32.totalorder %s14, 0
    %p49 = por %p47, %p48
    %p50 = scmp.ne.s32.totalorder %s36, %s37
    %p51 = scmp.eq.s32.totalorder %s15, 1
    %p52 = por %p50, %p51
    %p54 = scmp.ne.s32.totalorder %s37, %s53
    %p55 = scmp.eq.s32.totalorder %s15, 0
    %p56 = por %p54, %p55
    %s58 = sadd.s32 %s57, 1
    %p61 = scmp.eq.s32.totalorder %s9, 1
    %p62 = scmp.ne.s32.totalorder %s57, %s59
    %p63 = scmp.eq.s32.totalorder %s9, 0
    %p64 = por %p62, %p63
    %p65 = scmp.ne.s32.totalorder %s57, %s59
    %p66 = scmp.eq.s32.totalorder %s14, 1
    %p67 = por %p65, %p66
    %p68 = scmp.ne.s32.totalorder %s59, %s60
    %p69 = scmp.eq.s32.totalorder %s14, 0
    %p70 = por %p68, %p69
    %p71 = scmp.ne.s32.totalorder %s59, %s60
    %p72 = scmp.eq.s32.totalorder %s15, 1
    %p73 = por %p71, %p72
    %p75 = scmp.ne.s32.totalorder %s60, %s74
    %p76 = scmp.eq.s32.totalorder %s15, 0
    %p77 = por %p75, %p76
    %s79 = sadd.s32 %s78, 1
    %p82 = scmp.eq.s32.totalorder %s9, 1
    %p83 = scmp.ne.s32.totalorder %s78, %s80
    %p84 = scmp.eq.s32.totalorder %s9, 0
    %p85 = por %p83, %p84
    %p86 = scmp.ne.s32.totalorder %s78, %s80
    %p87 = scmp.eq.s32.totalorder %s14, 1
    %p88 = por %p86, %p87
    %p89 = scmp.ne.s32.totalorder %s80, %s81
    %p90 = scmp.eq.s32.totalorder %s14, 0
    %p91 = por %p89, %p90
    %p92 = scmp.ne.s32.totalorder %s80, %s81
    %p93 = scmp.eq.s32.totalorder %s15, 1
    %p94 = por %p92, %p93
    %p96 = scmp.ne.s32.totalorder %s81, %s95
    %p97 = scmp.eq.s32.totalorder %s15, 0
    %p98 = por %p96, %p97
    %s99 = ssub.s32 %s16, %s28
    %s100 = ssub.s32 %s17, %s24
    %s101 = sor.u32 %s99, %s100
    %p102 = scmp.eq.s32.totalorder %s101, 0
    %s104 = sadd.s32 %s103, 1
    %s105 = scalar_select %p102, %s103, %s104
    %p108 = pneg %p102
    %p109 = scmp.eq.s32.totalorder %s9, 1
    %p110 = por %p108, %p109
    %p111 = scmp.ne.s32.totalorder %s103, %s106
    %p112 = scmp.eq.s32.totalorder %s9, 0
    %p113 = por %p111, %p112
    %p114 = scmp.ne.s32.totalorder %s103, %s106
    %p115 = scmp.eq.s32.totalorder %s14, 1
    %p116 = por %p114, %p115
    %p117 = scmp.ne.s32.totalorder %s106, %s107
    %p118 = scmp.eq.s32.totalorder %s14, 0
    %p119 = por %p117, %p118
    %p120 = scmp.ne.s32.totalorder %s106, %s107
    %p121 = scmp.eq.s32.totalorder %s15, 1
    %p122 = por %p120, %p121
    %p124 = scmp.ne.s32.totalorder %s107, %s123
    %p125 = scmp.eq.s32.totalorder %s15, 0
    %p126 = por %p124, %p125
    %p127 = scmp.le.s32.totalorder 1, %s9
    %p128 = scmp.lt.s32.totalorder %s9, 3
    %p129 = pnand %p127, %p128
    %p130 = pneg %p129
    // Predicated region
    $region9: #{_engine_execute.1} parent=5 // pred_check
      _
    $region10: #{_engine_execute.1} parent=5 // pred_check_branch
      %132 = sbr.rel (%p129) target = $region12
    $region11: #{_engine_execute.1} parent=5 // pred_region
      %s133 = ssub.s32 %s9, 1
      // Predicated region
      $region13: #{_engine_execute.1} parent=11 // pred_check
        %p134 = pneg %p70
      $region14: #{_engine_execute.1} parent=11 // pred_check_branch
        %136 = sbr.rel (%p134) target = $region16
      $region15: #{_engine_execute.1} parent=11 // pred_region
        _
      $region16: #{_engine_execute.1} parent=11 // pred_fallthru
        _
      // Predicated region
      $region17: #{_engine_execute.1} parent=11 // pred_check
        %p137 = pneg %p91
      $region18: #{_engine_execute.1} parent=11 // pred_check_branch
        %139 = sbr.rel (%p137) target = $region20
      $region19: #{_engine_execute.1} parent=11 // pred_region
        _
      $region20: #{_engine_execute.1} parent=11 // pred_fallthru
        _
    $region12: #{_engine_execute.1} parent=5 // pred_fallthru
      _
    %p140 = scmp.lt.s32.totalorder %s9, 2
    // Predicated region
    $region21: #{_engine_execute.1} parent=5 // pred_check
      %p141 = pneg %p140
    $region22: #{_engine_execute.1} parent=5 // pred_check_branch
      %143 = sbr.rel (%p141) target = $region24
    $region23: #{_engine_execute.1} parent=5 // pred_region
      // Predicated region
      $region25: #{_engine_execute.1} parent=23 // pred_check
        %p144 = pneg %p43
      $region26: #{_engine_execute.1} parent=23 // pred_check_branch
        %146 = sbr.rel (%p144) target = $region28
      $region27: #{_engine_execute.1} parent=23 // pred_region
        %p147 = scmp.lt.s32.totalorder %s16, 1
        %s148 = scalar_select %p147, %s16, 1
        %p149 = scmp.lt.s32.totalorder %s17, 0
        %s150 = scalar_select %p149, %s17, 0
        %s151 = smul.addr %s150, 54
        %s152 = smul.addr %s148, 54
        %s153 = sadd.s32 %s151, %s152
        %s154 = smul.addr %s153, 4
        %s155 = scalar_lea.vmem %s0, %s154
      $region28: #{_engine_execute.1} parent=23 // pred_fallthru
        _
    $region24: #{_engine_execute.1} parent=5 // pred_fallthru
      _
    %p156 = scmp.le.s32.totalorder 1, %s9
    %p157 = scmp.lt.s32.totalorder %s9, 3
    %p158 = pnand %p156, %p157
    %p159 = pneg %p158
    // Predicated region
    $region29: #{_engine_execute.1} parent=5 // pred_check
      _
    $region30: #{_engine_execute.1} parent=5 // pred_check_branch
      %161 = sbr.rel (%p158) target = $region32
    $region31: #{_engine_execute.1} parent=5 // pred_region
      %s162 = ssub.s32 %s9, 1
      %p163 = scmp.lt.s32.totalorder %s18, 1
      %s164 = scalar_select %p163, %s18, 1
      %p165 = scmp.lt.s32.totalorder %s19, 0
      %s166 = scalar_select %p165, %s19, 0
      %s167 = smul.addr %s166, 54
      %s168 = smul.addr %s164, 54
      %s169 = sadd.s32 %s167, %s168
      %s170 = smul.addr %s169, 4
      %s171 = scalar_lea.vmem %s0, %s170
      %p172 = pneg %p49
      %p173 = pneg %p46
      %p174 = pneg %p70
      %p175 = pneg %p67
      %p176 = pneg %p91
      %p177 = pneg %p88
      %p178 = pneg %p119
      %p179 = pneg %p116
      %s180 = smul.u32 32, %s19
      %p181 = scmp.lt.s32.totalorder %s18, 1
      %s182 = scalar_select %p181, %s18, 1
      %p183 = scmp.lt.s32.totalorder %s180, 31
      %s184 = scalar_select %p183, %s180, 31
      %s185 = smul.addr %s182, 32
      %s186 = sadd.s32 %s184, %s185
      %s187 = smul.addr %s186, 4
      %s188 = scalar_lea.vmem %s3, %s187
      %p189 = scmp.lt.s32.totalorder %s18, 1
      %s190 = scalar_select %p189, %s18, 1
      %p191 = scmp.lt.s32.totalorder %s19, 0
      %s192 = scalar_select %p191, %s19, 0
      %s193 = smul.addr %s192, 54
      %s194 = smul.addr %s190, 54
      %s195 = sadd.s32 %s193, %s194
      %s196 = smul.addr %s195, 4
      %s197 = scalar_lea.vmem %s0, %s196
      %s198 = smul.u32 32, %s19
      %p199 = scmp.lt.s32.totalorder %s18, 1
      %s200 = scalar_select %p199, %s18, 1
      %p201 = scmp.lt.s32.totalorder %s198, 31
      %s202 = scalar_select %p201, %s198, 31
      %s203 = smul.addr %s200, 32
      %s204 = sadd.s32 %s202, %s203
      %s205 = smul.addr %s204, 4
      %s206 = scalar_lea.vmem %s3, %s205
      %s207 = smul.u32 32, %s19
      %v209 = vld [vmem:[%s197] sm:$0xf]
      %v210 = vld [vmem:[%s197 + $0x4] sm:$0xf]
      %v211 = vld [vmem:[%s197 + $0x8] sm:$0x1]
      %v212 = vld [vmem:[%s197 + $0xc] sm:$0xf]
      %v213 = vld [vmem:[%s197 + $0x10] sm:$0xf]
      %v214 = vld [vmem:[%s197 + $0x14] sm:$0x1]
      %v215 = vld [vmem:[%s197 + $0x18] sm:$0xf]
      %v216 = vld [vmem:[%s197 + $0x1c] sm:$0xf]
      %v217 = vld [vmem:[%s197 + $0x20] sm:$0x1]
      %v218 = vld [vmem:[%s197 + $0x24] sm:$0xf]
      %v219 = vld [vmem:[%s197 + $0x28] sm:$0xf]
      %v220 = vld [vmem:[%s197 + $0x2c] sm:$0x1]
      %v221 = vld [vmem:[%s197 + $0x30] sm:$0xf]
      %v222 = vld [vmem:[%s197 + $0x34] sm:$0xf]
      %v223 = vld [vmem:[%s197 + $0x38] sm:$0x1]
      %v224 = vld [vmem:[%s197 + $0x3c] sm:$0xf]
      %v225 = vld [vmem:[%s197 + $0x40] sm:$0xf]
      %v226 = vld [vmem:[%s197 + $0x44] sm:$0x1]
      %v227 = vld [vmem:[%s197 + $0x48] sm:$0xf]
      %v228 = vld [vmem:[%s197 + $0x4c] sm:$0xf]
      %v229 = vld [vmem:[%s197 + $0x50] sm:$0x1]
      %v230 = vld [vmem:[%s197 + $0x54] sm:$0xf]
      %v231 = vld [vmem:[%s197 + $0x58] sm:$0xf]
      %v232 = vld [vmem:[%s197 + $0x5c] sm:$0x1]
      %v233 = vld [vmem:[%s197 + $0x60] sm:$0xf]
      %v234 = vld [vmem:[%s197 + $0x64] sm:$0xf]
      %v235 = vld [vmem:[%s197 + $0x68] sm:$0x1]
      %v236 = vld [vmem:[%s197 + $0x6c] sm:$0xf]
      %v237 = vld [vmem:[%s197 + $0x70] sm:$0xf]
      %v238 = vld [vmem:[%s197 + $0x74] sm:$0x1]
      %v239 = vld [vmem:[%s197 + $0x78] sm:$0xf]
      %v240 = vld [vmem:[%s197 + $0x7c] sm:$0xf]
      %v241 = vld [vmem:[%s197 + $0x80] sm:$0x1]
      %v242 = vld [vmem:[%s197 + $0x84] sm:$0xf]
      %v243 = vld [vmem:[%s197 + $0x88] sm:$0xf]
      %v244 = vld [vmem:[%s197 + $0x8c] sm:$0x1]
      %v245 = vld [vmem:[%s197 + $0x90] sm:$0xf]
      %v246 = vld [vmem:[%s197 + $0x94] sm:$0xf]
      %v247 = vld [vmem:[%s197 + $0x98] sm:$0x1]
      %v248 = vld [vmem:[%s197 + $0x9c] sm:$0xf]
      %v249 = vld [vmem:[%s197 + $0xa0] sm:$0xf]
      %v250 = vld [vmem:[%s197 + $0xa4] sm:$0x1]
      %v251 = vld [vmem:[%s197 + $0xa8] sm:$0xf]
      %v252 = vld [vmem:[%s197 + $0xac] sm:$0xf]
      %v253 = vld [vmem:[%s197 + $0xb0] sm:$0x1]
      %v254 = vld [vmem:[%s197 + $0xb4] sm:$0xf]
      %v255 = vld [vmem:[%s197 + $0xb8] sm:$0xf]
      %v256 = vld [vmem:[%s197 + $0xbc] sm:$0x1]
      %v257 = vld [vmem:[%s197 + $0xc0] sm:$0xf]
      %v258 = vld [vmem:[%s197 + $0xc4] sm:$0xf]
      %v259 = vld [vmem:[%s197 + $0xc8] sm:$0x1]
      %v260 = vld [vmem:[%s197 + $0xcc] sm:$0xf]
      %v261 = vld [vmem:[%s197 + $0xd0] sm:$0xf]
      %v262 = vld [vmem:[%s197 + $0xd4] sm:$0x1]
      %v295 = vunpack.c.l.b16 %v209
      %v296 = vunpack.c.l.b16 %v210
      %v297 = vunpack.c.l.b16 %v212
      %v298 = vunpack.c.l.b16 %v213
      %v299 = vunpack.c.l.b16 %v215
      %v300 = vunpack.c.l.b16 %v216
      %v301 = vunpack.c.l.b16 %v218
      %v302 = vunpack.c.l.b16 %v219
      %v303 = vunpack.c.l.b16 %v221
      %v304 = vunpack.c.l.b16 %v222
      %v305 = vunpack.c.l.b16 %v224
      %v306 = vunpack.c.l.b16 %v225
      %v307 = vunpack.c.l.b16 %v227
      %v308 = vunpack.c.l.b16 %v228
      %v309 = vunpack.c.l.b16 %v230
      %v310 = vunpack.c.l.b16 %v231
      %v311 = vunpack.c.l.b16 %v233
      %v312 = vunpack.c.l.b16 %v234
      %v313 = vunpack.c.l.b16 %v236
      %v314 = vunpack.c.l.b16 %v237
      %v315 = vunpack.c.l.b16 %v239
      %v316 = vunpack.c.l.b16 %v240
      %v317 = vunpack.c.l.b16 %v242
      %v318 = vunpack.c.l.b16 %v243
      %v319 = vunpack.c.l.b16 %v245
      %v320 = vunpack.c.l.b16 %v246
      %v321 = vunpack.c.l.b16 %v248
      %v322 = vunpack.c.l.b16 %v249
      %v323 = vunpack.c.l.b16 %v251
      %v324 = vunpack.c.l.b16 %v252
      %v325 = vunpack.c.l.b16 %v254
      %v326 = vunpack.c.l.b16 %v255
      %v327 = vpack.c.b16 %v296, %v295
      %v328 = vpack.c.b16 %v298, %v297
      %v329 = vpack.c.b16 %v300, %v299
      %v330 = vpack.c.b16 %v302, %v301
      %v331 = vpack.c.b16 %v304, %v303
      %v332 = vpack.c.b16 %v306, %v305
      %v333 = vpack.c.b16 %v308, %v307
      %v334 = vpack.c.b16 %v310, %v309
      %v335 = vpack.c.b16 %v312, %v311
      %v336 = vpack.c.b16 %v314, %v313
      %v337 = vpack.c.b16 %v316, %v315
      %v338 = vpack.c.b16 %v318, %v317
      %v339 = vpack.c.b16 %v320, %v319
      %v340 = vpack.c.b16 %v322, %v321
      %v341 = vpack.c.b16 %v324, %v323
      %v342 = vpack.c.b16 %v326, %v325
      %v359 = vunpack.c.l.b16 %v211
      %v360 = vunpack.c.l.b16 %v214
      %v361 = vunpack.c.l.b16 %v217
      %v362 = vunpack.c.l.b16 %v220
      %v363 = vunpack.c.l.b16 %v223
      %v364 = vunpack.c.l.b16 %v226
      %v365 = vunpack.c.l.b16 %v229
      %v366 = vunpack.c.l.b16 %v232
      %v367 = vunpack.c.l.b16 %v235
      %v368 = vunpack.c.l.b16 %v238
      %v369 = vunpack.c.l.b16 %v241
      %v370 = vunpack.c.l.b16 %v244
      %v371 = vunpack.c.l.b16 %v247
      %v372 = vunpack.c.l.b16 %v250
      %v373 = vunpack.c.l.b16 %v253
      %v374 = vunpack.c.l.b16 %v256
      %v375 = vpack.c.b16 %v359, %v359
      %v376 = vpack.c.b16 %v360, %v360
      %v377 = vpack.c.b16 %v361, %v361
      %v378 = vpack.c.b16 %v362, %v362
      %v379 = vpack.c.b16 %v363, %v363
      %v380 = vpack.c.b16 %v364, %v364
      %v381 = vpack.c.b16 %v365, %v365
      %v382 = vpack.c.b16 %v366, %v366
      %v383 = vpack.c.b16 %v367, %v367
      %v384 = vpack.c.b16 %v368, %v368
      %v385 = vpack.c.b16 %v369, %v369
      %v386 = vpack.c.b16 %v370, %v370
      %v387 = vpack.c.b16 %v371, %v371
      %v388 = vpack.c.b16 %v372, %v372
      %v389 = vpack.c.b16 %v373, %v373
      %v390 = vpack.c.b16 %v374, %v374
      %vm391 = vsmask.f32 7424
      %v393 = vshrl.u32 %v327, 16
      %v395 = vshll.u32 %v327, 16
      %v397 = vrot.slane %v395, 1
      %v398 = vor.u32 %v393, %v397
      %v400 = vshll.u32 %v375, 16
      %v402 = vrot.slane %v400, 1
      %v403 = vsel %vm391, %v398, %v402
      %v405 = vshrl.u32 %v328, 16
      %v407 = vshll.u32 %v328, 16
      %v409 = vrot.slane %v407, 1
      %v410 = vor.u32 %v405, %v409
      %v412 = vshll.u32 %v376, 16
      %v414 = vrot.slane %v412, 1
      %v415 = vsel %vm391, %v410, %v414
      %v417 = vshrl.u32 %v329, 16
      %v419 = vshll.u32 %v329, 16
      %v421 = vrot.slane %v419, 1
      %v422 = vor.u32 %v417, %v421
      %v424 = vshll.u32 %v377, 16
      %v426 = vrot.slane %v424, 1
      %v427 = vsel %vm391, %v422, %v426
      %v429 = vshrl.u32 %v330, 16
      %v431 = vshll.u32 %v330, 16
      %v433 = vrot.slane %v431, 1
      %v434 = vor.u32 %v429, %v433
      %v436 = vshll.u32 %v378, 16
      %v438 = vrot.slane %v436, 1
      %v439 = vsel %vm391, %v434, %v438
      %v441 = vshrl.u32 %v331, 16
      %v443 = vshll.u32 %v331, 16
      %v445 = vrot.slane %v443, 1
      %v446 = vor.u32 %v441, %v445
      %v448 = vshll.u32 %v379, 16
      %v450 = vrot.slane %v448, 1
      %v451 = vsel %vm391, %v446, %v450
      %v453 = vshrl.u32 %v332, 16
      %v455 = vshll.u32 %v332, 16
      %v457 = vrot.slane %v455, 1
      %v458 = vor.u32 %v453, %v457
      %v460 = vshll.u32 %v380, 16
      %v462 = vrot.slane %v460, 1
      %v463 = vsel %vm391, %v458, %v462
      %v465 = vshrl.u32 %v333, 16
      %v467 = vshll.u32 %v333, 16
      %v469 = vrot.slane %v467, 1
      %v470 = vor.u32 %v465, %v469
      %v472 = vshll.u32 %v381, 16
      %v474 = vrot.slane %v472, 1
      %v475 = vsel %vm391, %v470, %v474
      %v477 = vshrl.u32 %v334, 16
      %v479 = vshll.u32 %v334, 16
      %v481 = vrot.slane %v479, 1
      %v482 = vor.u32 %v477, %v481
      %v484 = vshll.u32 %v382, 16
      %v486 = vrot.slane %v484, 1
      %v487 = vsel %vm391, %v482, %v486
      %v489 = vshrl.u32 %v335, 16
      %v491 = vshll.u32 %v335, 16
      %v493 = vrot.slane %v491, 1
      %v494 = vor.u32 %v489, %v493
      %v496 = vshll.u32 %v383, 16
      %v498 = vrot.slane %v496, 1
      %v499 = vsel %vm391, %v494, %v498
      %v501 = vshrl.u32 %v336, 16
      %v503 = vshll.u32 %v336, 16
      %v505 = vrot.slane %v503, 1
      %v506 = vor.u32 %v501, %v505
      %v508 = vshll.u32 %v384, 16
      %v510 = vrot.slane %v508, 1
      %v511 = vsel %vm391, %v506, %v510
      %v513 = vshrl.u32 %v337, 16
      %v515 = vshll.u32 %v337, 16
      %v517 = vrot.slane %v515, 1
      %v518 = vor.u32 %v513, %v517
      %v520 = vshll.u32 %v385, 16
      %v522 = vrot.slane %v520, 1
      %v523 = vsel %vm391, %v518, %v522
      %v525 = vshrl.u32 %v338, 16
      %v527 = vshll.u32 %v338, 16
      %v529 = vrot.slane %v527, 1
      %v530 = vor.u32 %v525, %v529
      %v532 = vshll.u32 %v386, 16
      %v534 = vrot.slane %v532, 1
      %v535 = vsel %vm391, %v530, %v534
      %v537 = vshrl.u32 %v339, 16
      %v539 = vshll.u32 %v339, 16
      %v541 = vrot.slane %v539, 1
      %v542 = vor.u32 %v537, %v541
      %v544 = vshll.u32 %v387, 16
      %v546 = vrot.slane %v544, 1
      %v547 = vsel %vm391, %v542, %v546
      %v549 = vshrl.u32 %v340, 16
      %v551 = vshll.u32 %v340, 16
      %v553 = vrot.slane %v551, 1
      %v554 = vor.u32 %v549, %v553
      %v556 = vshll.u32 %v388, 16
      %v558 = vrot.slane %v556, 1
      %v559 = vsel %vm391, %v554, %v558
      %v561 = vshrl.u32 %v341, 16
      %v563 = vshll.u32 %v341, 16
      %v565 = vrot.slane %v563, 1
      %v566 = vor.u32 %v561, %v565
      %v568 = vshll.u32 %v389, 16
      %v570 = vrot.slane %v568, 1
      %v571 = vsel %vm391, %v566, %v570
      %v573 = vshrl.u32 %v342, 16
      %v575 = vshll.u32 %v342, 16
      %v577 = vrot.slane %v575, 1
      %v578 = vor.u32 %v573, %v577
      %v580 = vshll.u32 %v390, 16
      %v582 = vrot.slane %v580, 1
      %v583 = vsel %vm391, %v578, %v582
      %584 = vrot.lane.b32.xlu0 %v403, 4
      %v585 = vpop.permute.xlu0 %584
      %586 = vrot.lane.b32.xlu0 %v415, 4
      %v587 = vpop.permute.xlu0 %586
      %588 = vrot.lane.b32.xlu0 %v427, 4
      %v589 = vpop.permute.xlu0 %588
      %590 = vrot.lane.b32.xlu0 %v439, 4
      %v591 = vpop.permute.xlu0 %590
      %592 = vrot.lane.b32.xlu0 %v451, 4
      %v593 = vpop.permute.xlu0 %592
      %594 = vrot.lane.b32.xlu0 %v463, 4
      %v595 = vpop.permute.xlu0 %594
      %596 = vrot.lane.b32.xlu0 %v475, 4
      %v597 = vpop.permute.xlu0 %596
      %598 = vrot.lane.b32.xlu0 %v487, 4
      %v599 = vpop.permute.xlu0 %598
      %600 = vrot.lane.b32.xlu0 %v499, 4
      %v601 = vpop.permute.xlu0 %600
      %602 = vrot.lane.b32.xlu0 %v511, 4
      %v603 = vpop.permute.xlu0 %602
      %604 = vrot.lane.b32.xlu0 %v523, 4
      %v605 = vpop.permute.xlu0 %604
      %606 = vrot.lane.b32.xlu0 %v535, 4
      %v607 = vpop.permute.xlu0 %606
      %608 = vrot.lane.b32.xlu0 %v547, 4
      %v609 = vpop.permute.xlu0 %608
      %610 = vrot.lane.b32.xlu0 %v559, 4
      %v611 = vpop.permute.xlu0 %610
      %612 = vrot.lane.b32.xlu0 %v571, 4
      %v613 = vpop.permute.xlu0 %612
      %614 = vrot.lane.b32.xlu0 %v583, 4
      %v615 = vpop.permute.xlu0 %614
      %vm616 = vcmask 1046528
      %v617 = vrot.slane %v327, 1
      %v618 = vrot.slane %v375, 1
      %v619 = vsel %vm616, %v617, %v618
      %v620 = vrot.slane %v328, 1
      %v621 = vrot.slane %v376, 1
      %v622 = vsel %vm616, %v620, %v621
      %v623 = vrot.slane %v329, 1
      %v624 = vrot.slane %v377, 1
      %v625 = vsel %vm616, %v623, %v624
      %v626 = vrot.slane %v330, 1
      %v627 = vrot.slane %v378, 1
      %v628 = vsel %vm616, %v626, %v627
      %v629 = vrot.slane %v331, 1
      %v630 = vrot.slane %v379, 1
      %v631 = vsel %vm616, %v629, %v630
      %v632 = vrot.slane %v332, 1
      %v633 = vrot.slane %v380, 1
      %v634 = vsel %vm616, %v632, %v633
      %v635 = vrot.slane %v333, 1
      %v636 = vrot.slane %v381, 1
      %v637 = vsel %vm616, %v635, %v636
      %v638 = vrot.slane %v334, 1
      %v639 = vrot.slane %v382, 1
      %v640 = vsel %vm616, %v638, %v639
      %v641 = vrot.slane %v335, 1
      %v642 = vrot.slane %v383, 1
      %v643 = vsel %vm616, %v641, %v642
      %v644 = vrot.slane %v336, 1
      %v645 = vrot.slane %v384, 1
      %v646 = vsel %vm616, %v644, %v645
      %v647 = vrot.slane %v337, 1
      %v648 = vrot.slane %v385, 1
      %v649 = vsel %vm616, %v647, %v648
      %v650 = vrot.slane %v338, 1
      %v651 = vrot.slane %v386, 1
      %v652 = vsel %vm616, %v650, %v651
      %v653 = vrot.slane %v339, 1
      %v654 = vrot.slane %v387, 1
      %v655 = vsel %vm616, %v653, %v654
      %v656 = vrot.slane %v340, 1
      %v657 = vrot.slane %v388, 1
      %v658 = vsel %vm616, %v656, %v657
      %v659 = vrot.slane %v341, 1
      %v660 = vrot.slane %v389, 1
      %v661 = vsel %vm616, %v659, %v660
      %v662 = vrot.slane %v342, 1
      %v663 = vrot.slane %v390, 1
      %v664 = vsel %vm616, %v662, %v663
      %665 = vrot.lane.b32.xlu0 %v619, 8
      %v666 = vpop.permute.xlu0 %665
      %667 = vrot.lane.b32.xlu0 %v622, 8
      %v668 = vpop.permute.xlu0 %667
      %669 = vrot.lane.b32.xlu0 %v625, 8
      %v670 = vpop.permute.xlu0 %669
      %671 = vrot.lane.b32.xlu0 %v628, 8
      %v672 = vpop.permute.xlu0 %671
      %673 = vrot.lane.b32.xlu0 %v631, 8
      %v674 = vpop.permute.xlu0 %673
      %675 = vrot.lane.b32.xlu0 %v634, 8
      %v676 = vpop.permute.xlu0 %675
      %677 = vrot.lane.b32.xlu0 %v637, 8
      %v678 = vpop.permute.xlu0 %677
      %679 = vrot.lane.b32.xlu0 %v640, 8
      %v680 = vpop.permute.xlu0 %679
      %681 = vrot.lane.b32.xlu0 %v643, 8
      %v682 = vpop.permute.xlu0 %681
      %683 = vrot.lane.b32.xlu0 %v646, 8
      %v684 = vpop.permute.xlu0 %683
      %685 = vrot.lane.b32.xlu0 %v649, 8
      %v686 = vpop.permute.xlu0 %685
      %687 = vrot.lane.b32.xlu0 %v652, 8
      %v688 = vpop.permute.xlu0 %687
      %689 = vrot.lane.b32.xlu0 %v655, 8
      %v690 = vpop.permute.xlu0 %689
      %691 = vrot.lane.b32.xlu0 %v658, 8
      %v692 = vpop.permute.xlu0 %691
      %693 = vrot.lane.b32.xlu0 %v661, 8
      %v694 = vpop.permute.xlu0 %693
      %695 = vrot.lane.b32.xlu0 %v664, 8
      %v696 = vpop.permute.xlu0 %695
      %v699 = vunpack.c.l.b16 %v257
      %v700 = vunpack.c.l.b16 %v258
      %v701 = vpack.c.b16 %v700, %v699
      %702 = vrot.lane.b32.xlu0 %v328, 12
      %v703 = vpop.permute.xlu0 %702
      %704 = vrot.lane.b32.xlu0 %v329, 12
      %v705 = vpop.permute.xlu0 %704
      %706 = vrot.lane.b32.xlu0 %v330, 12
      %v707 = vpop.permute.xlu0 %706
      %708 = vrot.lane.b32.xlu0 %v331, 12
      %v709 = vpop.permute.xlu0 %708
      %710 = vrot.lane.b32.xlu0 %v332, 12
      %v711 = vpop.permute.xlu0 %710
      %712 = vrot.lane.b32.xlu0 %v333, 12
      %v713 = vpop.permute.xlu0 %712
      %714 = vrot.lane.b32.xlu0 %v334, 12
      %v715 = vpop.permute.xlu0 %714
      %716 = vrot.lane.b32.xlu0 %v335, 12
      %v717 = vpop.permute.xlu0 %716
      %718 = vrot.lane.b32.xlu0 %v336, 12
      %v719 = vpop.permute.xlu0 %718
      %720 = vrot.lane.b32.xlu0 %v337, 12
      %v721 = vpop.permute.xlu0 %720
      %722 = vrot.lane.b32.xlu0 %v338, 12
      %v723 = vpop.permute.xlu0 %722
      %724 = vrot.lane.b32.xlu0 %v339, 12
      %v725 = vpop.permute.xlu0 %724
      %726 = vrot.lane.b32.xlu0 %v340, 12
      %v727 = vpop.permute.xlu0 %726
      %728 = vrot.lane.b32.xlu0 %v341, 12
      %v729 = vpop.permute.xlu0 %728
      %730 = vrot.lane.b32.xlu0 %v342, 12
      %v731 = vpop.permute.xlu0 %730
      %732 = vrot.lane.b32.xlu0 %v701, 12
      %v733 = vpop.permute.xlu0 %732
      %v735 = vunpack.c.l.b16 %v259
      %v736 = vpack.c.b16 %v735, %v735
      %v738 = vshrl.u32 %v701, 16
      %v740 = vshll.u32 %v701, 16
      %v742 = vrot.slane %v740, 1
      %v743 = vor.u32 %v738, %v742
      %v745 = vshll.u32 %v736, 16
      %v747 = vrot.slane %v745, 1
      %v748 = vsel %vm391, %v743, %v747
      %749 = vrot.lane.b32.xlu0 %v415, 16
      %v750 = vpop.permute.xlu0 %749
      %751 = vrot.lane.b32.xlu0 %v427, 16
      %v752 = vpop.permute.xlu0 %751
      %753 = vrot.lane.b32.xlu0 %v439, 16
      %v754 = vpop.permute.xlu0 %753
      %755 = vrot.lane.b32.xlu0 %v451, 16
      %v756 = vpop.permute.xlu0 %755
      %757 = vrot.lane.b32.xlu0 %v463, 16
      %v758 = vpop.permute.xlu0 %757
      %759 = vrot.lane.b32.xlu0 %v475, 16
      %v760 = vpop.permute.xlu0 %759
      %761 = vrot.lane.b32.xlu0 %v487, 16
      %v762 = vpop.permute.xlu0 %761
      %763 = vrot.lane.b32.xlu0 %v499, 16
      %v764 = vpop.permute.xlu0 %763
      %765 = vrot.lane.b32.xlu0 %v511, 16
      %v766 = vpop.permute.xlu0 %765
      %767 = vrot.lane.b32.xlu0 %v523, 16
      %v768 = vpop.permute.xlu0 %767
      %769 = vrot.lane.b32.xlu0 %v535, 16
      %v770 = vpop.permute.xlu0 %769
      %771 = vrot.lane.b32.xlu0 %v547, 16
      %v772 = vpop.permute.xlu0 %771
      %773 = vrot.lane.b32.xlu0 %v559, 16
      %v774 = vpop.permute.xlu0 %773
      %775 = vrot.lane.b32.xlu0 %v571, 16
      %v776 = vpop.permute.xlu0 %775
      %777 = vrot.lane.b32.xlu0 %v583, 16
      %v778 = vpop.permute.xlu0 %777
      %779 = vrot.lane.b32.xlu0 %v748, 16
      %v780 = vpop.permute.xlu0 %779
      %v781 = vrot.slane %v701, 1
      %v782 = vrot.slane %v736, 1
      %v783 = vsel %vm616, %v781, %v782
      %784 = vrot.lane.b32.xlu0 %v622, 20
      %v785 = vpop.permute.xlu0 %784
      %786 = vrot.lane.b32.xlu0 %v625, 20
      %v787 = vpop.permute.xlu0 %786
      %788 = vrot.lane.b32.xlu0 %v628, 20
      %v789 = vpop.permute.xlu0 %788
      %790 = vrot.lane.b32.xlu0 %v631, 20
      %v791 = vpop.permute.xlu0 %790
      %792 = vrot.lane.b32.xlu0 %v634, 20
      %v793 = vpop.permute.xlu0 %792
      %794 = vrot.lane.b32.xlu0 %v637, 20
      %v795 = vpop.permute.xlu0 %794
      %796 = vrot.lane.b32.xlu0 %v640, 20
      %v797 = vpop.permute.xlu0 %796
      %798 = vrot.lane.b32.xlu0 %v643, 20
      %v799 = vpop.permute.xlu0 %798
      %800 = vrot.lane.b32.xlu0 %v646, 20
      %v801 = vpop.permute.xlu0 %800
      %802 = vrot.lane.b32.xlu0 %v649, 20
      %v803 = vpop.permute.xlu0 %802
      %804 = vrot.lane.b32.xlu0 %v652, 20
      %v805 = vpop.permute.xlu0 %804
      %806 = vrot.lane.b32.xlu0 %v655, 20
      %v807 = vpop.permute.xlu0 %806
      %808 = vrot.lane.b32.xlu0 %v658, 20
      %v809 = vpop.permute.xlu0 %808
      %810 = vrot.lane.b32.xlu0 %v661, 20
      %v811 = vpop.permute.xlu0 %810
      %812 = vrot.lane.b32.xlu0 %v664, 20
      %v813 = vpop.permute.xlu0 %812
      %814 = vrot.lane.b32.xlu0 %v783, 20
      %v815 = vpop.permute.xlu0 %814
      %v818 = vunpack.c.l.b16 %v260
      %v819 = vunpack.c.l.b16 %v261
      %v820 = vpack.c.b16 %v819, %v818
      %821 = vrot.lane.b32.xlu0 %v329, 24
      %v822 = vpop.permute.xlu0 %821
      %823 = vrot.lane.b32.xlu0 %v330, 24
      %v824 = vpop.permute.xlu0 %823
      %825 = vrot.lane.b32.xlu0 %v331, 24
      %v826 = vpop.permute.xlu0 %825
      %827 = vrot.lane.b32.xlu0 %v332, 24
      %v828 = vpop.permute.xlu0 %827
      %829 = vrot.lane.b32.xlu0 %v333, 24
      %v830 = vpop.permute.xlu0 %829
      %831 = vrot.lane.b32.xlu0 %v334, 24
      %v832 = vpop.permute.xlu0 %831
      %833 = vrot.lane.b32.xlu0 %v335, 24
      %v834 = vpop.permute.xlu0 %833
      %835 = vrot.lane.b32.xlu0 %v336, 24
      %v836 = vpop.permute.xlu0 %835
      %837 = vrot.lane.b32.xlu0 %v337, 24
      %v838 = vpop.permute.xlu0 %837
      %839 = vrot.lane.b32.xlu0 %v338, 24
      %v840 = vpop.permute.xlu0 %839
      %841 = vrot.lane.b32.xlu0 %v339, 24
      %v842 = vpop.permute.xlu0 %841
      %843 = vrot.lane.b32.xlu0 %v340, 24
      %v844 = vpop.permute.xlu0 %843
      %845 = vrot.lane.b32.xlu0 %v341, 24
      %v846 = vpop.permute.xlu0 %845
      %847 = vrot.lane.b32.xlu0 %v342, 24
      %v848 = vpop.permute.xlu0 %847
      %849 = vrot.lane.b32.xlu0 %v701, 24
      %v850 = vpop.permute.xlu0 %849
      %851 = vrot.lane.b32.xlu0 %v820, 24
      %v852 = vpop.permute.xlu0 %851
      %v854 = vunpack.c.l.b16 %v262
      %v855 = vpack.c.b16 %v854, %v854
      %v857 = vshrl.u32 %v820, 16
      %v859 = vshll.u32 %v820, 16
      %v861 = vrot.slane %v859, 1
      %v862 = vor.u32 %v857, %v861
      %v864 = vshll.u32 %v855, 16
      %v866 = vrot.slane %v864, 1
      %v867 = vsel %vm391, %v862, %v866
      %868 = vrot.lane.b32.xlu0 %v427, 28
      %v869 = vpop.permute.xlu0 %868
      %870 = vrot.lane.b32.xlu0 %v439, 28
      %v871 = vpop.permute.xlu0 %870
      %872 = vrot.lane.b32.xlu0 %v451, 28
      %v873 = vpop.permute.xlu0 %872
      %874 = vrot.lane.b32.xlu0 %v463, 28
      %v875 = vpop.permute.xlu0 %874
      %876 = vrot.lane.b32.xlu0 %v475, 28
      %v877 = vpop.permute.xlu0 %876
      %878 = vrot.lane.b32.xlu0 %v487, 28
      %v879 = vpop.permute.xlu0 %878
      %880 = vrot.lane.b32.xlu0 %v499, 28
      %v881 = vpop.permute.xlu0 %880
      %882 = vrot.lane.b32.xlu0 %v511, 28
      %v883 = vpop.permute.xlu0 %882
      %884 = vrot.lane.b32.xlu0 %v523, 28
      %v885 = vpop.permute.xlu0 %884
      %886 = vrot.lane.b32.xlu0 %v535, 28
      %v887 = vpop.permute.xlu0 %886
      %888 = vrot.lane.b32.xlu0 %v547, 28
      %v889 = vpop.permute.xlu0 %888
      %890 = vrot.lane.b32.xlu0 %v559, 28
      %v891 = vpop.permute.xlu0 %890
      %892 = vrot.lane.b32.xlu0 %v571, 28
      %v893 = vpop.permute.xlu0 %892
      %894 = vrot.lane.b32.xlu0 %v583, 28
      %v895 = vpop.permute.xlu0 %894
      %896 = vrot.lane.b32.xlu0 %v748, 28
      %v897 = vpop.permute.xlu0 %896
      %898 = vrot.lane.b32.xlu0 %v867, 28
      %v899 = vpop.permute.xlu0 %898
      %v900 = vrot.slane %v820, 1
      %v901 = vrot.slane %v855, 1
      %v902 = vsel %vm616, %v900, %v901
      %903 = vrot.lane.b32.xlu0 %v625, 32
      %v904 = vpop.permute.xlu0 %903
      %905 = vrot.lane.b32.xlu0 %v628, 32
      %v906 = vpop.permute.xlu0 %905
      %907 = vrot.lane.b32.xlu0 %v631, 32
      %v908 = vpop.permute.xlu0 %907
      %909 = vrot.lane.b32.xlu0 %v634, 32
      %v910 = vpop.permute.xlu0 %909
      %911 = vrot.lane.b32.xlu0 %v637, 32
      %v912 = vpop.permute.xlu0 %911
      %913 = vrot.lane.b32.xlu0 %v640, 32
      %v914 = vpop.permute.xlu0 %913
      %915 = vrot.lane.b32.xlu0 %v643, 32
      %v916 = vpop.permute.xlu0 %915
      %917 = vrot.lane.b32.xlu0 %v646, 32
      %v918 = vpop.permute.xlu0 %917
      %919 = vrot.lane.b32.xlu0 %v649, 32
      %v920 = vpop.permute.xlu0 %919
      %921 = vrot.lane.b32.xlu0 %v652, 32
      %v922 = vpop.permute.xlu0 %921
      %923 = vrot.lane.b32.xlu0 %v655, 32
      %v924 = vpop.permute.xlu0 %923
      %925 = vrot.lane.b32.xlu0 %v658, 32
      %v926 = vpop.permute.xlu0 %925
      %927 = vrot.lane.b32.xlu0 %v661, 32
      %v928 = vpop.permute.xlu0 %927
      %929 = vrot.lane.b32.xlu0 %v664, 32
      %v930 = vpop.permute.xlu0 %929
      %931 = vrot.lane.b32.xlu0 %v783, 32
      %v932 = vpop.permute.xlu0 %931
      %933 = vrot.lane.b32.xlu0 %v902, 32
      %v934 = vpop.permute.xlu0 %933
      %vm935 = vcmask 31744
      %v937 = vsel %vm935, %v327, %v585
      %v939 = vsel %vm935, %v328, %v587
      %v941 = vsel %vm935, %v329, %v589
      %v943 = vsel %vm935, %v330, %v591
      %v945 = vsel %vm935, %v331, %v593
      %v947 = vsel %vm935, %v332, %v595
      %v949 = vsel %vm935, %v333, %v597
      %v951 = vsel %vm935, %v334, %v599
      %v953 = vsel %vm935, %v335, %v601
      %v955 = vsel %vm935, %v336, %v603
      %v957 = vsel %vm935, %v337, %v605
      %v959 = vsel %vm935, %v338, %v607
      %v961 = vsel %vm935, %v339, %v609
      %v963 = vsel %vm935, %v340, %v611
      %v965 = vsel %vm935, %v341, %v613
      %v967 = vsel %vm935, %v342, %v615
      %vm968 = vcmask 64512
      %v970 = vsel %vm968, %v937, %v666
      %v972 = vsel %vm968, %v939, %v668
      %v974 = vsel %vm968, %v941, %v670
      %v976 = vsel %vm968, %v943, %v672
      %v978 = vsel %vm968, %v945, %v674
      %v980 = vsel %vm968, %v947, %v676
      %v982 = vsel %vm968, %v949, %v678
      %v984 = vsel %vm968, %v951, %v680
      %v986 = vsel %vm968, %v953, %v682
      %v988 = vsel %vm968, %v955, %v684
      %v990 = vsel %vm968, %v957, %v686
      %v992 = vsel %vm968, %v959, %v688
      %v994 = vsel %vm968, %v961, %v690
      %v996 = vsel %vm968, %v963, %v692
      %v998 = vsel %vm968, %v965, %v694
      %v1000 = vsel %vm968, %v967, %v696
      %vm1001 = vcmask 97280
      %v1003 = vsel %vm1001, %v970, %v703
      %v1005 = vsel %vm1001, %v972, %v705
      %v1007 = vsel %vm1001, %v974, %v707
      %v1009 = vsel %vm1001, %v976, %v709
      %v1011 = vsel %vm1001, %v978, %v711
      %v1013 = vsel %vm1001, %v980, %v713
      %v1015 = vsel %vm1001, %v982, %v715
      %v1017 = vsel %vm1001, %v984, %v717
      %v1019 = vsel %vm1001, %v986, %v719
      %v1021 = vsel %vm1001, %v988, %v721
      %v1023 = vsel %vm1001, %v990, %v723
      %v1025 = vsel %vm1001, %v992, %v725
      %v1027 = vsel %vm1001, %v994, %v727
      %v1029 = vsel %vm1001, %v996, %v729
      %v1031 = vsel %vm1001, %v998, %v731
      %v1033 = vsel %vm1001, %v1000, %v733
      %vm1034 = vcmask 130048
      %v1036 = vsel %vm1034, %v1003, %v750
      %v1038 = vsel %vm1034, %v1005, %v752
      %v1040 = vsel %vm1034, %v1007, %v754
      %v1042 = vsel %vm1034, %v1009, %v756
      %v1044 = vsel %vm1034, %v1011, %v758
      %v1046 = vsel %vm1034, %v1013, %v760
      %v1048 = vsel %vm1034, %v1015, %v762
      %v1050 = vsel %vm1034, %v1017, %v764
      %v1052 = vsel %vm1034, %v1019, %v766
      %v1054 = vsel %vm1034, %v1021, %v768
      %v1056 = vsel %vm1034, %v1023, %v770
      %v1058 = vsel %vm1034, %v1025, %v772
      %v1060 = vsel %vm1034, %v1027, %v774
      %v1062 = vsel %vm1034, %v1029, %v776
      %v1064 = vsel %vm1034, %v1031, %v778
      %v1066 = vsel %vm1034, %v1033, %v780
      %vm1067 = vcmask 162816
      %v1069 = vsel %vm1067, %v1036, %v785
      %v1071 = vsel %vm1067, %v1038, %v787
      %v1073 = vsel %vm1067, %v1040, %v789
      %v1075 = vsel %vm1067, %v1042, %v791
      %v1077 = vsel %vm1067, %v1044, %v793
      %v1079 = vsel %vm1067, %v1046, %v795
      %v1081 = vsel %vm1067, %v1048, %v797
      %v1083 = vsel %vm1067, %v1050, %v799
      %v1085 = vsel %vm1067, %v1052, %v801
      %v1087 = vsel %vm1067, %v1054, %v803
      %v1089 = vsel %vm1067, %v1056, %v805
      %v1091 = vsel %vm1067, %v1058, %v807
      %v1093 = vsel %vm1067, %v1060, %v809
      %v1095 = vsel %vm1067, %v1062, %v811
      %v1097 = vsel %vm1067, %v1064, %v813
      %v1099 = vsel %vm1067, %v1066, %v815
      %vm1100 = vcmask 195584
      %v1102 = vsel %vm1100, %v1069, %v822
      %v1104 = vsel %vm1100, %v1071, %v824
      %v1106 = vsel %vm1100, %v1073, %v826
      %v1108 = vsel %vm1100, %v1075, %v828
      %v1110 = vsel %vm1100, %v1077, %v830
      %v1112 = vsel %vm1100, %v1079, %v832
      %v1114 = vsel %vm1100, %v1081, %v834
      %v1116 = vsel %vm1100, %v1083, %v836
      %v1118 = vsel %vm1100, %v1085, %v838
      %v1120 = vsel %vm1100, %v1087, %v840
      %v1122 = vsel %vm1100, %v1089, %v842
      %v1124 = vsel %vm1100, %v1091, %v844
      %v1126 = vsel %vm1100, %v1093, %v846
      %v1128 = vsel %vm1100, %v1095, %v848
      %v1130 = vsel %vm1100, %v1097, %v850
      %v1132 = vsel %vm1100, %v1099, %v852
      %vm1133 = vcmask 228352
      %v1135 = vsel %vm1133, %v1102, %v869
      %v1137 = vsel %vm1133, %v1104, %v871
      %v1139 = vsel %vm1133, %v1106, %v873
      %v1141 = vsel %vm1133, %v1108, %v875
      %v1143 = vsel %vm1133, %v1110, %v877
      %v1145 = vsel %vm1133, %v1112, %v879
      %v1147 = vsel %vm1133, %v1114, %v881
      %v1149 = vsel %vm1133, %v1116, %v883
      %v1151 = vsel %vm1133, %v1118, %v885
      %v1153 = vsel %vm1133, %v1120, %v887
      %v1155 = vsel %vm1133, %v1122, %v889
      %v1157 = vsel %vm1133, %v1124, %v891
      %v1159 = vsel %vm1133, %v1126, %v893
      %v1161 = vsel %vm1133, %v1128, %v895
      %v1163 = vsel %vm1133, %v1130, %v897
      %v1165 = vsel %vm1133, %v1132, %v899
      %vm1166 = vcmask 261120
      %v1168 = vsel %vm1166, %v1135, %v904
      %v1170 = vsel %vm1166, %v1137, %v906
      %v1172 = vsel %vm1166, %v1139, %v908
      %v1174 = vsel %vm1166, %v1141, %v910
      %v1176 = vsel %vm1166, %v1143, %v912
      %v1178 = vsel %vm1166, %v1145, %v914
      %v1180 = vsel %vm1166, %v1147, %v916
      %v1182 = vsel %vm1166, %v1149, %v918
      %v1184 = vsel %vm1166, %v1151, %v920
      %v1186 = vsel %vm1166, %v1153, %v922
      %v1188 = vsel %vm1166, %v1155, %v924
      %v1190 = vsel %vm1166, %v1157, %v926
      %v1192 = vsel %vm1166, %v1159, %v928
      %v1194 = vsel %vm1166, %v1161, %v930
      %v1196 = vsel %vm1166, %v1163, %v932
      %v1198 = vsel %vm1166, %v1165, %v934
      %v1199 = vld [vmem:[%s1] sm:$0xf]
      %v1200 = vld [vmem:[%s1 + $0x4] sm:$0xf]
      %v1201 = vld [vmem:[%s1 + $0x8] sm:$0xf]
      %v1202 = vld [vmem:[%s1 + $0xc] sm:$0xf]
      %v1203 = vld [vmem:[%s1 + $0x10] sm:$0x3]
      %v1204 = vld [vmem:[%s2] sm:$0x1]
      %v1206 = vperm.slane %v1204, 0
      %v1213 = vunpack.c.l.b16 %v1199
      %v1214 = vunpack.c.l.b16 %v1200
      %v1215 = vunpack.c.l.b16 %v1201
      %v1216 = vunpack.c.l.b16 %v1202
      %v1217 = vunpack.c.l.b16 %v1203
      %v1218 = vpack.c.b16 %v1214, %v1213
      %v1219 = vpack.c.b16 %v1216, %v1215
      %v1220 = vpack.c.b16 %v1217, %v1217
      %vm1223 = vcmask 293888
      %v1224 = vsel %vm1223, %v1168, 0
      %v1226 = vsel %vm1223, %v1170, 0
      %v1228 = vsel %vm1223, %v1172, 0
      %v1230 = vsel %vm1223, %v1174, 0
      %v1232 = vsel %vm1223, %v1176, 0
      %v1234 = vsel %vm1223, %v1178, 0
      %v1236 = vsel %vm1223, %v1180, 0
      %v1238 = vsel %vm1223, %v1182, 0
      %v1240 = vsel %vm1223, %v1184, 0
      %v1242 = vsel %vm1223, %v1186, 0
      %v1244 = vsel %vm1223, %v1188, 0
      %v1246 = vsel %vm1223, %v1190, 0
      %v1248 = vsel %vm1223, %v1192, 0
      %v1250 = vsel %vm1223, %v1194, 0
      %v1252 = vsel %vm1223, %v1196, 0
      %v1254 = vsel %vm1223, %v1198, 0
      %vm1256 = vcmask 1041408
      %v1258 = vsel %vm1256, %v1220, 0
      %1260 = vmatpush.bf16.msra.mxu0 0
      %1261 = vmatpush.bf16.msra.mxu0 0
      %1262 = vmatpush.bf16.msra.mxu0 0
      %1263 = vmatpush.bf16.msra.mxu0 0
      %1264 = vmatpush.bf16.msra.mxu0 0
      %1265 = vmatpush.bf16.msra.mxu0 %v1258
      %1266 = vmatpush.bf16.msra.mxu0 %v1219
      %1267 = vmatpush.bf16.msra.mxu0 %v1218
      %1268 = vmatmul.bf16.gmra.mxu0 %v1224
      %v1269 = vpop.f32.mrf.mxu0
      %v1270 = vadd.f32 %v1206, %v1269
      %v1271 = vpop.f32.mrf.mxu0
      %v1272 = vadd.f32 %v1206, %v1271
      %1273 = vmatmul.bf16.gmra.mxu0 %v1226
      %v1274 = vpop.f32.mrf.mxu0
      %v1275 = vadd.f32 %v1206, %v1274
      %v1276 = vpop.f32.mrf.mxu0
      %v1277 = vadd.f32 %v1206, %v1276
      %1278 = vmatmul.bf16.gmra.mxu0 %v1228
      %v1279 = vpop.f32.mrf.mxu0
      %v1280 = vadd.f32 %v1206, %v1279
      %v1281 = vpop.f32.mrf.mxu0
      %v1282 = vadd.f32 %v1206, %v1281
      %1283 = vmatmul.bf16.gmra.mxu0 %v1230
      %v1284 = vpop.f32.mrf.mxu0
      %v1285 = vadd.f32 %v1206, %v1284
      %v1286 = vpop.f32.mrf.mxu0
      %v1287 = vadd.f32 %v1206, %v1286
      %1288 = vmatmul.bf16.gmra.mxu0 %v1232
      %v1289 = vpop.f32.mrf.mxu0
      %v1290 = vadd.f32 %v1206, %v1289
      %v1291 = vpop.f32.mrf.mxu0
      %v1292 = vadd.f32 %v1206, %v1291
      %1293 = vmatmul.bf16.gmra.mxu0 %v1234
      %v1294 = vpop.f32.mrf.mxu0
      %v1295 = vadd.f32 %v1206, %v1294
      %v1296 = vpop.f32.mrf.mxu0
      %v1297 = vadd.f32 %v1206, %v1296
      %1298 = vmatmul.bf16.gmra.mxu0 %v1236
      %v1299 = vpop.f32.mrf.mxu0
      %v1300 = vadd.f32 %v1206, %v1299
      %v1301 = vpop.f32.mrf.mxu0
      %v1302 = vadd.f32 %v1206, %v1301
      %1303 = vmatmul.bf16.gmra.mxu0 %v1238
      %v1304 = vpop.f32.mrf.mxu0
      %v1305 = vadd.f32 %v1206, %v1304
      %v1306 = vpop.f32.mrf.mxu0
      %v1307 = vadd.f32 %v1206, %v1306
      %1308 = vmatmul.bf16.gmra.mxu0 %v1240
      %v1309 = vpop.f32.mrf.mxu0
      %v1310 = vadd.f32 %v1206, %v1309
      %v1311 = vpop.f32.mrf.mxu0
      %v1312 = vadd.f32 %v1206, %v1311
      %1313 = vmatmul.bf16.gmra.mxu0 %v1242
      %v1314 = vpop.f32.mrf.mxu0
      %v1315 = vadd.f32 %v1206, %v1314
      %v1316 = vpop.f32.mrf.mxu0
      %v1317 = vadd.f32 %v1206, %v1316
      %1318 = vmatmul.bf16.gmra.mxu0 %v1244
      %v1319 = vpop.f32.mrf.mxu0
      %v1320 = vadd.f32 %v1206, %v1319
      %v1321 = vpop.f32.mrf.mxu0
      %v1322 = vadd.f32 %v1206, %v1321
      %1323 = vmatmul.bf16.gmra.mxu0 %v1246
      %v1324 = vpop.f32.mrf.mxu0
      %v1325 = vadd.f32 %v1206, %v1324
      %v1326 = vpop.f32.mrf.mxu0
      %v1327 = vadd.f32 %v1206, %v1326
      %1328 = vmatmul.bf16.gmra.mxu0 %v1248
      %v1329 = vpop.f32.mrf.mxu0
      %v1330 = vadd.f32 %v1206, %v1329
      %v1331 = vpop.f32.mrf.mxu0
      %v1332 = vadd.f32 %v1206, %v1331
      %1333 = vmatmul.bf16.gmra.mxu0 %v1250
      %v1334 = vpop.f32.mrf.mxu0
      %v1335 = vadd.f32 %v1206, %v1334
      %v1336 = vpop.f32.mrf.mxu0
      %v1337 = vadd.f32 %v1206, %v1336
      %1338 = vmatmul.bf16.gmra.mxu0 %v1252
      %v1339 = vpop.f32.mrf.mxu0
      %v1340 = vadd.f32 %v1206, %v1339
      %v1341 = vpop.f32.mrf.mxu0
      %v1342 = vadd.f32 %v1206, %v1341
      %1343 = vmatmul.bf16.gmra.mxu0 %v1254
      %v1344 = vpop.f32.mrf.mxu0
      %v1345 = vadd.f32 %v1206, %v1344
      %v1346 = vpop.f32.mrf.mxu0
      %v1347 = vadd.f32 %v1206, %v1346
      %1348 = vdwg.mxu0
      %v1349 = vmul.f32 %v1270, 0.5
      %v1350 = vmul.f32 %v1272, 0.5
      %v1351 = vmul.f32 %v1275, 0.5
      %v1352 = vmul.f32 %v1277, 0.5
      %v1353 = vmul.f32 %v1280, 0.5
      %v1354 = vmul.f32 %v1282, 0.5
      %v1355 = vmul.f32 %v1285, 0.5
      %v1356 = vmul.f32 %v1287, 0.5
      %v1357 = vmul.f32 %v1290, 0.5
      %v1358 = vmul.f32 %v1292, 0.5
      %v1359 = vmul.f32 %v1295, 0.5
      %v1360 = vmul.f32 %v1297, 0.5
      %v1361 = vmul.f32 %v1300, 0.5
      %v1362 = vmul.f32 %v1302, 0.5
      %v1363 = vmul.f32 %v1305, 0.5
      %v1364 = vmul.f32 %v1307, 0.5
      %v1365 = vmul.f32 %v1310, 0.5
      %v1366 = vmul.f32 %v1312, 0.5
      %v1367 = vmul.f32 %v1315, 0.5
      %v1368 = vmul.f32 %v1317, 0.5
      %v1369 = vmul.f32 %v1320, 0.5
      %v1370 = vmul.f32 %v1322, 0.5
      %v1371 = vmul.f32 %v1325, 0.5
      %v1372 = vmul.f32 %v1327, 0.5
      %v1373 = vmul.f32 %v1330, 0.5
      %v1374 = vmul.f32 %v1332, 0.5
      %v1375 = vmul.f32 %v1335, 0.5
      %v1376 = vmul.f32 %v1337, 0.5
      %v1377 = vmul.f32 %v1340, 0.5
      %v1378 = vmul.f32 %v1342, 0.5
      %v1379 = vmul.f32 %v1345, 0.5
      %v1380 = vmul.f32 %v1347, 0.5
      %v1381 = vtanh.pop %v1349
      %v1382 = vtanh.pop %v1350
      %v1383 = vtanh.pop %v1351
      %v1384 = vtanh.pop %v1352
      %v1385 = vtanh.pop %v1353
      %v1386 = vtanh.pop %v1354
      %v1387 = vtanh.pop %v1355
      %v1388 = vtanh.pop %v1356
      %v1389 = vtanh.pop %v1357
      %v1390 = vtanh.pop %v1358
      %v1391 = vtanh.pop %v1359
      %v1392 = vtanh.pop %v1360
      %v1393 = vtanh.pop %v1361
      %v1394 = vtanh.pop %v1362
      %v1395 = vtanh.pop %v1363
      %v1396 = vtanh.pop %v1364
      %v1397 = vtanh.pop %v1365
      %v1398 = vtanh.pop %v1366
      %v1399 = vtanh.pop %v1367
      %v1400 = vtanh.pop %v1368
      %v1401 = vtanh.pop %v1369
      %v1402 = vtanh.pop %v1370
      %v1403 = vtanh.pop %v1371
      %v1404 = vtanh.pop %v1372
      %v1405 = vtanh.pop %v1373
      %v1406 = vtanh.pop %v1374
      %v1407 = vtanh.pop %v1375
      %v1408 = vtanh.pop %v1376
      %v1409 = vtanh.pop %v1377
      %v1410 = vtanh.pop %v1378
      %v1411 = vtanh.pop %v1379
      %v1412 = vtanh.pop %v1380
      %v1413 = vadd.f32 %v1381, 1.0
      %v1414 = vadd.f32 %v1382, 1.0
      %v1415 = vadd.f32 %v1383, 1.0
      %v1416 = vadd.f32 %v1384, 1.0
      %v1417 = vadd.f32 %v1385, 1.0
      %v1418 = vadd.f32 %v1386, 1.0
      %v1419 = vadd.f32 %v1387, 1.0
      %v1420 = vadd.f32 %v1388, 1.0
      %v1421 = vadd.f32 %v1389, 1.0
      %v1422 = vadd.f32 %v1390, 1.0
      %v1423 = vadd.f32 %v1391, 1.0
      %v1424 = vadd.f32 %v1392, 1.0
      %v1425 = vadd.f32 %v1393, 1.0
      %v1426 = vadd.f32 %v1394, 1.0
      %v1427 = vadd.f32 %v1395, 1.0
      %v1428 = vadd.f32 %v1396, 1.0
      %v1429 = vadd.f32 %v1397, 1.0
      %v1430 = vadd.f32 %v1398, 1.0
      %v1431 = vadd.f32 %v1399, 1.0
      %v1432 = vadd.f32 %v1400, 1.0
      %v1433 = vadd.f32 %v1401, 1.0
      %v1434 = vadd.f32 %v1402, 1.0
      %v1435 = vadd.f32 %v1403, 1.0
      %v1436 = vadd.f32 %v1404, 1.0
      %v1437 = vadd.f32 %v1405, 1.0
      %v1438 = vadd.f32 %v1406, 1.0
      %v1439 = vadd.f32 %v1407, 1.0
      %v1440 = vadd.f32 %v1408, 1.0
      %v1441 = vadd.f32 %v1409, 1.0
      %v1442 = vadd.f32 %v1410, 1.0
      %v1443 = vadd.f32 %v1411, 1.0
      %v1444 = vadd.f32 %v1412, 1.0
      %v1445 = vmul.f32 %v1413, 0.5
      %v1446 = vmul.f32 %v1414, 0.5
      %v1447 = vmul.f32 %v1415, 0.5
      %v1448 = vmul.f32 %v1416, 0.5
      %v1449 = vmul.f32 %v1417, 0.5
      %v1450 = vmul.f32 %v1418, 0.5
      %v1451 = vmul.f32 %v1419, 0.5
      %v1452 = vmul.f32 %v1420, 0.5
      %v1453 = vmul.f32 %v1421, 0.5
      %v1454 = vmul.f32 %v1422, 0.5
      %v1455 = vmul.f32 %v1423, 0.5
      %v1456 = vmul.f32 %v1424, 0.5
      %v1457 = vmul.f32 %v1425, 0.5
      %v1458 = vmul.f32 %v1426, 0.5
      %v1459 = vmul.f32 %v1427, 0.5
      %v1460 = vmul.f32 %v1428, 0.5
      %v1461 = vmul.f32 %v1429, 0.5
      %v1462 = vmul.f32 %v1430, 0.5
      %v1463 = vmul.f32 %v1431, 0.5
      %v1464 = vmul.f32 %v1432, 0.5
      %v1465 = vmul.f32 %v1433, 0.5
      %v1466 = vmul.f32 %v1434, 0.5
      %v1467 = vmul.f32 %v1435, 0.5
      %v1468 = vmul.f32 %v1436, 0.5
      %v1469 = vmul.f32 %v1437, 0.5
      %v1470 = vmul.f32 %v1438, 0.5
      %v1471 = vmul.f32 %v1439, 0.5
      %v1472 = vmul.f32 %v1440, 0.5
      %v1473 = vmul.f32 %v1441, 0.5
      %v1474 = vmul.f32 %v1442, 0.5
      %v1475 = vmul.f32 %v1443, 0.5
      %v1476 = vmul.f32 %v1444, 0.5
      %v1477 = vmul.f32 %v1270, %v1445
      %v1478 = vmul.f32 %v1272, %v1446
      %v1479 = vmul.f32 %v1275, %v1447
      %v1480 = vmul.f32 %v1277, %v1448
      %v1481 = vmul.f32 %v1280, %v1449
      %v1482 = vmul.f32 %v1282, %v1450
      %v1483 = vmul.f32 %v1285, %v1451
      %v1484 = vmul.f32 %v1287, %v1452
      %v1485 = vmul.f32 %v1290, %v1453
      %v1486 = vmul.f32 %v1292, %v1454
      %v1487 = vmul.f32 %v1295, %v1455
      %v1488 = vmul.f32 %v1297, %v1456
      %v1489 = vmul.f32 %v1300, %v1457
      %v1490 = vmul.f32 %v1302, %v1458
      %v1491 = vmul.f32 %v1305, %v1459
      %v1492 = vmul.f32 %v1307, %v1460
      %v1493 = vmul.f32 %v1310, %v1461
      %v1494 = vmul.f32 %v1312, %v1462
      %v1495 = vmul.f32 %v1315, %v1463
      %v1496 = vmul.f32 %v1317, %v1464
      %v1497 = vmul.f32 %v1320, %v1465
      %v1498 = vmul.f32 %v1322, %v1466
      %v1499 = vmul.f32 %v1325, %v1467
      %v1500 = vmul.f32 %v1327, %v1468
      %v1501 = vmul.f32 %v1330, %v1469
      %v1502 = vmul.f32 %v1332, %v1470
      %v1503 = vmul.f32 %v1335, %v1471
      %v1504 = vmul.f32 %v1337, %v1472
      %v1505 = vmul.f32 %v1340, %v1473
      %v1506 = vmul.f32 %v1342, %v1474
      %v1507 = vmul.f32 %v1345, %v1475
      %v1508 = vmul.f32 %v1347, %v1476
      %v1509 = vpack.c.bf16 %v1477, %v1477
      %v1510 = vpack.c.bf16 %v1478, %v1478
      %v1511 = vpack.c.bf16 %v1479, %v1479
      %v1512 = vpack.c.bf16 %v1480, %v1480
      %v1513 = vpack.c.bf16 %v1481, %v1481
      %v1514 = vpack.c.bf16 %v1482, %v1482
      %v1515 = vpack.c.bf16 %v1483, %v1483
      %v1516 = vpack.c.bf16 %v1484, %v1484
      %v1517 = vpack.c.bf16 %v1485, %v1485
      %v1518 = vpack.c.bf16 %v1486, %v1486
      %v1519 = vpack.c.bf16 %v1487, %v1487
      %v1520 = vpack.c.bf16 %v1488, %v1488
      %v1521 = vpack.c.bf16 %v1489, %v1489
      %v1522 = vpack.c.bf16 %v1490, %v1490
      %v1523 = vpack.c.bf16 %v1491, %v1491
      %v1524 = vpack.c.bf16 %v1492, %v1492
      %v1525 = vpack.c.bf16 %v1493, %v1493
      %v1526 = vpack.c.bf16 %v1494, %v1494
      %v1527 = vpack.c.bf16 %v1495, %v1495
      %v1528 = vpack.c.bf16 %v1496, %v1496
      %v1529 = vpack.c.bf16 %v1497, %v1497
      %v1530 = vpack.c.bf16 %v1498, %v1498
      %v1531 = vpack.c.bf16 %v1499, %v1499
      %v1532 = vpack.c.bf16 %v1500, %v1500
      %v1533 = vpack.c.bf16 %v1501, %v1501
      %v1534 = vpack.c.bf16 %v1502, %v1502
      %v1535 = vpack.c.bf16 %v1503, %v1503
      %v1536 = vpack.c.bf16 %v1504, %v1504
      %v1537 = vpack.c.bf16 %v1505, %v1505
      %v1538 = vpack.c.bf16 %v1506, %v1506
      %v1539 = vpack.c.bf16 %v1507, %v1507
      %v1540 = vpack.c.bf16 %v1508, %v1508
      %vm1541 = vcmask 60416
      %1542 = vst.msk [vmem:[%s206] sm:$0xf] %vm1541, %v1509
      %1543 = vst.msk [vmem:[%s206 + $0x4] sm:$0xf] %vm1541, %v1510
      %1544 = vst.msk [vmem:[%s206 + $0x8] sm:$0xf] %vm1541, %v1511
      %1545 = vst.msk [vmem:[%s206 + $0xc] sm:$0xf] %vm1541, %v1512
      %1546 = vst.msk [vmem:[%s206 + $0x10] sm:$0xf] %vm1541, %v1513
      %1547 = vst.msk [vmem:[%s206 + $0x14] sm:$0xf] %vm1541, %v1514
      %1548 = vst.msk [vmem:[%s206 + $0x18] sm:$0xf] %vm1541, %v1515
      %1549 = vst.msk [vmem:[%s206 + $0x1c] sm:$0xf] %vm1541, %v1516
      %1550 = vst.msk [vmem:[%s206 + $0x20] sm:$0xf] %vm1541, %v1517
      %1551 = vst.msk [vmem:[%s206 + $0x24] sm:$0xf] %vm1541, %v1518
      %1552 = vst.msk [vmem:[%s206 + $0x28] sm:$0xf] %vm1541, %v1519
      %1553 = vst.msk [vmem:[%s206 + $0x2c] sm:$0xf] %vm1541, %v1520
      %1554 = vst.msk [vmem:[%s206 + $0x30] sm:$0xf] %vm1541, %v1521
      %1555 = vst.msk [vmem:[%s206 + $0x34] sm:$0xf] %vm1541, %v1522
      %1556 = vst.msk [vmem:[%s206 + $0x38] sm:$0xf] %vm1541, %v1523
      %1557 = vst.msk [vmem:[%s206 + $0x3c] sm:$0xf] %vm1541, %v1524
      %1558 = vst.msk [vmem:[%s206 + $0x40] sm:$0xf] %vm1541, %v1525
      %1559 = vst.msk [vmem:[%s206 + $0x44] sm:$0xf] %vm1541, %v1526
      %1560 = vst.msk [vmem:[%s206 + $0x48] sm:$0xf] %vm1541, %v1527
      %1561 = vst.msk [vmem:[%s206 + $0x4c] sm:$0xf] %vm1541, %v1528
      %1562 = vst.msk [vmem:[%s206 + $0x50] sm:$0xf] %vm1541, %v1529
      %1563 = vst.msk [vmem:[%s206 + $0x54] sm:$0xf] %vm1541, %v1530
      %1564 = vst.msk [vmem:[%s206 + $0x58] sm:$0xf] %vm1541, %v1531
      %1565 = vst.msk [vmem:[%s206 + $0x5c] sm:$0xf] %vm1541, %v1532
      %1566 = vst.msk [vmem:[%s206 + $0x60] sm:$0xf] %vm1541, %v1533
      %1567 = vst.msk [vmem:[%s206 + $0x64] sm:$0xf] %vm1541, %v1534
      %1568 = vst.msk [vmem:[%s206 + $0x68] sm:$0xf] %vm1541, %v1535
      %1569 = vst.msk [vmem:[%s206 + $0x6c] sm:$0xf] %vm1541, %v1536
      %1570 = vst.msk [vmem:[%s206 + $0x70] sm:$0xf] %vm1541, %v1537
      %1571 = vst.msk [vmem:[%s206 + $0x74] sm:$0xf] %vm1541, %v1538
      %1572 = vst.msk [vmem:[%s206 + $0x78] sm:$0xf] %vm1541, %v1539
      %1573 = vst.msk [vmem:[%s206 + $0x7c] sm:$0xf] %vm1541, %v1540
      %s1574 = smul.u32 32, %s19
      %p1575 = scmp.lt.s32.totalorder %s18, 1
      %s1576 = scalar_select %p1575, %s18, 1
      %p1577 = scmp.lt.s32.totalorder %s1574, 31
      %s1578 = scalar_select %p1577, %s1574, 31
      %s1579 = smul.addr %s1576, 32
      %s1580 = sadd.s32 %s1578, %s1579
      %s1581 = smul.addr %s1580, 4
      %s1582 = scalar_lea.vmem %s3, %s1581
      // Predicated region
      $region33: #{_engine_execute.1} parent=31 // pred_check
        %p1583 = pneg %p116
      $region34: #{_engine_execute.1} parent=31 // pred_check_branch
        %1585 = sbr.rel (%p1583) target = $region36
      $region35: #{_engine_execute.1} parent=31 // pred_region
        %s1586 = smul.u32 32, %s19
      $region36: #{_engine_execute.1} parent=31 // pred_fallthru
        _
    $region32: #{_engine_execute.1} parent=5 // pred_fallthru
      _
    %p1587 = scmp.le.s32.totalorder 2, %s9
    // Predicated region
    $region37: #{_engine_execute.1} parent=5 // pred_check
      %p1588 = pneg %p1587
    $region38: #{_engine_execute.1} parent=5 // pred_check_branch
      %1590 = sbr.rel (%p1588) target = $region40
    $region39: #{_engine_execute.1} parent=5 // pred_region
      %s1591 = ssub.s32 %s9, 2
      // Predicated region
      $region41: #{_engine_execute.1} parent=39 // pred_check
        %p1592 = pneg %p122
      $region42: #{_engine_execute.1} parent=39 // pred_check_branch
        %1594 = sbr.rel (%p1592) target = $region44
      $region43: #{_engine_execute.1} parent=39 // pred_region
        %s1595 = smul.u32 32, %s21
        %p1596 = scmp.lt.s32.totalorder %s20, 1
        %s1597 = scalar_select %p1596, %s20, 1
        %p1598 = scmp.lt.s32.totalorder %s1595, 31
        %s1599 = scalar_select %p1598, %s1595, 31
        %s1600 = smul.addr %s1597, 32
        %s1601 = sadd.s32 %s1599, %s1600
        %s1602 = smul.addr %s1601, 4
        %s1603 = scalar_lea.vmem %s3, %s1602
      $region44: #{_engine_execute.1} parent=39 // pred_fallthru
        _
    $region40: #{_engine_execute.1} parent=5 // pred_fallthru
      _
  $region6: #{_engine_execute.1} parent=0 // loop_footer
    %s13 = sadd.s32 1, %s9
  $region7: #{_engine_execute.1} parent=0 // loop_footer_branch
    %8 = sbr.rel target = $region3
  $region8: #{_engine_execute.1} parent=0 // loop_exit
    _

</llo_original>
